<compile_context>
chip_gen: v6e
topology: v6e:2x2x1
jax: 0.10.0
libtpu: 0.0.40
codegen_flags: <defaults>
</compile_context>

<pallas_src>
import jax
import jax.numpy as jnp
from jax.experimental import pallas as pl
from jax.experimental.pallas import tpu as pltpu

_MiB = 1024 * 1024


# ---------------------------------------------------------------------------
# Generation-aware VMEM budgets.
# ---------------------------------------------------------------------------
def _vmem_capacity_bytes():
    """Physical VMEM per TensorCore; conservative 64 MiB fallback (v7x-sized)."""
    try:
        cap = int(getattr(pltpu.get_tpu_info(), "vmem_capacity_bytes", 0))
        if cap > 0:
            return cap
    except Exception:
        pass
    return 64 * _MiB


def _chip_budgets():
    cap = _vmem_capacity_bytes()
    if cap >= 96 * _MiB:
        # v5e / v6e class (128 MiB VMEM): allow big resident slabs and deeper
        # input buffering in the streaming pass.
        return dict(
            vmem_limit_cap=min(cap - 20 * _MiB, 108 * _MiB),
            single_pass_slab_max=20 * _MiB,
            tile_budget=28 * _MiB,
            deep_buffer=True,
            small_vmem=False,
        )
    # v7x class (64 MiB VMEM): leave compiler / internal-scratch headroom.
    return dict(
        vmem_limit_cap=min(max(cap - 12 * _MiB, 24 * _MiB), 52 * _MiB),
        single_pass_slab_max=10 * _MiB,
        tile_budget=16 * _MiB,
        deep_buffer=False,
        small_vmem=True,
    )


# ---------------------------------------------------------------------------
# Single-pass kernel: whole (C, HW) slab per batch resident in VMEM.
# ---------------------------------------------------------------------------
def _make_fused_kernel(exact_f32, inv_hw):
    prec = jax.lax.Precision.HIGHEST if exact_f32 else None

    def kernel(x_ref, w_ref, b_ref, o_ref):
        # x_ref: (1, C, HW)   w_ref: (C, C)   b_ref: (C, 1)   o_ref: (1, C, HW)
        x = x_ref[0]                                   # (C, HW): C sublanes, HW lanes

        if exact_f32:
            # Exact f32 lane reduction (XLU) — free in an HBM-bound kernel.
            pooled = jnp.sum(x, axis=-1, keepdims=True) * inv_hw          # (C, 1) f32
        else:
            # MXU pool: (C, HW) @ (HW, 1), f32 accumulation.
            ones_col = jnp.ones((x.shape[-1], 1), dtype=x.dtype)
            pooled = jnp.dot(x, ones_col,
                             preferred_element_type=jnp.float32) * inv_hw  # (C, 1) f32

        # 1x1 conv == dense layer: fc[co] = sum_ci W[co, ci] * pooled[ci] + b[co].
        # W stays in its natural (C_out, C_in) layout -> no transpose.
        fc = jnp.dot(w_ref[...], pooled.astype(w_ref.dtype),
                     precision=prec,
                     preferred_element_type=jnp.float32) + b_ref[...]
        # Cast the gate to x's dtype BEFORE the broadcast multiply so the big
        # (C, HW) product stays in x's dtype (no f32 slab temporary for bf16).
        att = jax.nn.sigmoid(fc).astype(x.dtype)                           # (C, 1)

        # (C, HW) * (C, 1): lane-axis broadcast of the gate (free).
        o_ref[0] = (x * att).astype(o_ref.dtype)

    return kernel


def _channel_attention_single_pass(x_flat, w2d, b_col, budgets, donate_x):
    B, C, HW = x_flat.shape
    itemsize = jnp.dtype(x_flat.dtype).itemsize
    slab = C * HW * itemsize
    w_bytes = C * C * jnp.dtype(w2d.dtype).itemsize
    # in (2 bufs) + out (2 bufs) + ~1 slab of temporaries + params, with margin.
    vmem_limit = int(min(budgets["vmem_limit_cap"],
                         max(16 * _MiB, 5 * slab + w_bytes + 4 * _MiB)))

    kernel = _make_fused_kernel(x_flat.dtype == jnp.float32, 1.0 / float(HW))
    kwargs = {"input_output_aliases": {0: 0}} if donate_x else {}

    return pl.pallas_call(
        kernel,
        out_shape=jax.ShapeDtypeStruct((B, C, HW), x_flat.dtype),
        grid=(B,),
        in_specs=[
            pl.BlockSpec((1, C, HW), lambda b: (b, 0, 0)),   # per-batch x slab
            pl.BlockSpec((C, C), lambda b: (0, 0)),          # 1x1-conv weight
            pl.BlockSpec((C, 1), lambda b: (0, 0)),          # bias column (f32)
        ],
        out_specs=pl.BlockSpec((1, C, HW), lambda b: (b, 0, 0)),
        compiler_params=pltpu.CompilerParams(
            dimension_semantics=("parallel",),
            vmem_limit_bytes=vmem_limit,
        ),
        **kwargs,
    )(x_flat, w2d, b_col)


# ---------------------------------------------------------------------------
# Two-pass fallback: HW-tiled pool+FC, then lane-dense HW-tiled scale.
# ---------------------------------------------------------------------------
def _pick_hw_tile(hw, c, itemsize, budget_bytes, vmem_factor):
    """Largest multiple-of-128 HW tile fitting the per-pass VMEM budget,
    preferring an exact divisor of HW so no boundary masking is needed.
    Tiny HW (< 128) uses the full extent (no padding, single tile)."""
    if hw <= 128:
        return hw
    max_tile = max(128, int(budget_bytes // (vmem_factor * c * itemsize)) // 128 * 128)
    start = max(128, min(max_tile, (hw // 128) * 128))
    for cand in range(start, 0, -128):
        if hw % cand == 0:
            return cand
    return start   # no exact divisor -> boundary tile gets masked


def _channel_attention_two_pass(x_flat, w2d, b_col, budgets, *,
                                hw_tile=None, donate_x=False):
    B, C, HW = x_flat.shape
    itemsize = jnp.dtype(x_flat.dtype).itemsize
    w_bytes = C * C * jnp.dtype(w2d.dtype).itemsize
    exact_f32 = x_flat.dtype == jnp.float32
    inv_hw = 1.0 / float(HW)            # divide by the TRUE HW, not padded size
    prec = jax.lax.Precision.HIGHEST if exact_f32 else None

    if hw_tile is not None:
        hw_tile1 = hw_tile2 = int(hw_tile)
    else:
        # Pass 1 has no output slab to double-buffer -> VMEM factor ~3.
        # Pass 2 double-buffers input AND output                -> factor ~5.
        hw_tile1 = _pick_hw_tile(HW, C, itemsize, budgets["tile_budget"], 3)
        hw_tile2 = _pick_hw_tile(HW, C, itemsize, budgets["tile_budget"], 5)

    # ---- pass 1: pooled sum over HW tiles -> FC -> sigmoid -> att (B, C, 1)
    n_hw1 = pl.cdiv(HW, hw_tile1)
    needs_mask = (HW % hw_tile1) != 0

    def pool_fc_kernel(x_ref, w_ref, b_ref, att_ref, acc_ref):
        h = pl.program_id(1)
        is_last = h == pl.num_programs(1) - 1

        @pl.when(h == 0)
        def _init():
            acc_ref[...] = jnp.zeros_like(acc_ref)

        x = x_ref[0]                                            # (C, hw_tile1)

        def accumulate(v):
            if exact_f32:
                acc_ref[...] += jnp.sum(v, axis=-1, keepdims=True)
            else:
                ones_col = jnp.ones((v.shape[-1], 1), dtype=v.dtype)
                acc_ref[...] += jnp.dot(v, ones_col,
                                        preferred_element_type=jnp.float32)

        if needs_mask:
            # Boundary mask only on the LAST tile; interior tiles skip the
            # iota/compare/select entirely (keeps VALU slack, esp. on v5e).
            @pl.when(jnp.logical_not(is_last))
            def _interior():
                accumulate(x)

            @pl.when(is_last)
            def _boundary():
                lane = jax.lax.broadcasted_iota(jnp.int32, x.shape, 1)
                valid = (h * hw_tile1 + lane) < HW
                accumulate(jnp.where(valid, x, jnp.zeros_like(x)))
        else:
            accumulate(x)

        @pl.when(is_last)
        def _finalize():
            pooled = acc_ref[...] * inv_hw                      # (C, 1) f32
            fc = jnp.dot(w_ref[...], pooled.astype(w_ref.dtype),
                         precision=prec,
                         preferred_element_type=jnp.float32) + b_ref[...]
            att_ref[0] = jax.nn.sigmoid(fc).astype(att_ref.dtype)

    tile1_bytes = C * hw_tile1 * itemsize
    n_buf1 = 3 if budgets["deep_buffer"] else 2
    vmem1 = int(min(budgets["vmem_limit_cap"],
                    max(16 * _MiB, n_buf1 * tile1_bytes + w_bytes + 2 * _MiB)))

    x_spec1 = pl.BlockSpec((1, C, hw_tile1), lambda b, h: (b, 0, h))
    if budgets["deep_buffer"]:
        # Pass 1 is pure streaming with near-zero compute to hide DMA jitter
        # behind; a third input buffer keeps the HBM read pipe full (plenty of
        # VMEM headroom on v5e/v6e). Guarded for API availability.
        try:
            x_spec1 = pl.BlockSpec((1, C, hw_tile1), lambda b, h: (b, 0, h),
                                   pipeline_mode=pl.Buffered(3))
        except TypeError:
            pass

    att = pl.pallas_call(
        pool_fc_kernel,
        out_shape=jax.ShapeDtypeStruct((B, C, 1), x_flat.dtype),
        grid=(B, n_hw1),
        in_specs=[
            x_spec1,
            pl.BlockSpec((C, C), lambda b, h: (0, 0)),
            pl.BlockSpec((C, 1), lambda b, h: (0, 0)),
        ],
        out_specs=pl.BlockSpec((1, C, 1), lambda b, h: (b, 0, 0)),
        scratch_shapes=[pltpu.VMEM((C, 1), jnp.float32)],
        compiler_params=pltpu.CompilerParams(
            dimension_semantics=("parallel", "arbitrary"),
            vmem_limit_bytes=vmem1,
        ),
    )(x_flat, w2d, b_col)

    # ---- pass 2: lane-dense scale  y = x * att  (both axes parallel so the
    # megacore / v7x's 2 TensorCores get work even when B == 1).
    n_hw2 = pl.cdiv(HW, hw_tile2)

    def scale_kernel(x_ref, att_ref, o_ref):
        # att is already in x's dtype -> the multiply stays narrow.
        o_ref[0] = (x_ref[0] * att_ref[0]).astype(o_ref.dtype)

    tile2_bytes = C * hw_tile2 * itemsize
    vmem2 = int(min(budgets["vmem_limit_cap"],
                    max(16 * _MiB, 5 * tile2_bytes + 2 * _MiB)))
    kwargs = {"input_output_aliases": {0: 0}} if donate_x else {}

    return pl.pallas_call(
        scale_kernel,
        out_shape=jax.ShapeDtypeStruct((B, C, HW), x_flat.dtype),
        grid=(B, n_hw2),
        in_specs=[
            pl.BlockSpec((1, C, hw_tile2), lambda b, h: (b, 0, h)),
            pl.BlockSpec((1, C, 1), lambda b, h: (b, 0, 0)),
        ],
        out_specs=pl.BlockSpec((1, C, hw_tile2), lambda b, h: (b, 0, h)),
        compiler_params=pltpu.CompilerParams(
            dimension_semantics=("parallel", "parallel"),
            vmem_limit_bytes=vmem2,
        ),
        **kwargs,
    )(x_flat, att)


# ---------------------------------------------------------------------------
# Public wrapper.
# ---------------------------------------------------------------------------
def channel_attention(x_nchw, weight, bias, *, force_two_pass=False,
                      hw_tile=None, donate_x=False):
    """x_nchw: (B, C, H, W); weight: (C, C, 1, 1); bias: (C,).

    Output keeps x's dtype (bf16 in -> bf16 out). Weights are carried in x's
    dtype (halves weight traffic / VMEM); the bias and all accumulations stay
    f32. Set donate_x=True if x's buffer can be overwritten by the output.
    """
    B, C, H, W = x_nchw.shape
    HW = H * W
    x_flat = x_nchw.reshape(B, C, HW)
    w2d = weight.reshape(C, C).astype(x_nchw.dtype)   # natural (C_out, C_in) layout
    b_col = bias.reshape(C, 1).astype(jnp.float32)    # (C, 1) sublane-major column

    budgets = _chip_budgets()
    slab_bytes = C * HW * jnp.dtype(x_flat.dtype).itemsize

    two_pass = force_two_pass or slab_bytes > budgets["single_pass_slab_max"]
    # v7x (2 TensorCores, small VMEM): for B == 1 the single-pass grid=(B,)
    # leaves one core idle; the bandwidth-dominant scale pass of the two-pass
    # path can be sharded across both cores instead. Heuristic — verify with a
    # trace on real shapes.
    if (not two_pass) and budgets["small_vmem"] and B == 1 and slab_bytes > 4 * _MiB:
        two_pass = True

    if two_pass:
        out_flat = _channel_attention_two_pass(x_flat, w2d, b_col, budgets,
                                               hw_tile=hw_tile, donate_x=donate_x)
    else:
        out_flat = _channel_attention_single_pass(x_flat, w2d, b_col, budgets,
                                                  donate_x=donate_x)
    return out_flat.reshape(B, C, H, W)


def _reference(x, weight, bias):
    # Pure-JAX reference matching the PyTorch module semantics (in f32).
    B, C, H, W = x.shape
    xf = x.astype(jnp.float32)
    pooled = jnp.mean(xf, axis=(2, 3))                                     # (B, C)
    fc = pooled @ weight.reshape(C, C).astype(jnp.float32).T \
        + bias.astype(jnp.float32)[None, :]                                # (B, C)
    att = jax.nn.sigmoid(fc)
    return xf * att[:, :, None, None]


if __name__ == "__main__":
    key = jax.random.PRNGKey(0)
    kx, kw, kb = jax.random.split(key, 3)

    B, C, H, W = 2, 4, 16, 16
    x = jax.random.normal(kx, (B, C, H, W), dtype=jnp.float32)
    # Deterministic synthetic parameters (Conv2d(C, C, 1, 1) with bias).
    weight = jax.random.normal(kw, (C, C, 1, 1), dtype=jnp.float32) * 0.1
    bias = jax.random.normal(kb, (C,), dtype=jnp.float32) * 0.1

    ref = _reference(x, weight, bias)

    # Single-pass (default) path. f32 path is now exact (XLU pool sum,
    # HIGHEST-precision FC), so the tolerance can be tight.
    out = jax.block_until_ready(channel_attention(x, weight, bias))
    assert out.shape == (B, C, H, W)
    assert jnp.allclose(out, ref, atol=1e-5, rtol=1e-5), "single-pass f32 mismatch"

    # Exercise the HW-tiled two-pass fallback (used when the (C, HW) slab does
    # not fit the per-generation VMEM budget, e.g. large images on v7x).
    out2 = jax.block_until_ready(
        channel_attention(x, weight, bias, force_two_pass=True, hw_tile=128))
    assert jnp.allclose(out2, ref, atol=1e-5, rtol=1e-5), "two-pass f32 mismatch"

    # bf16 path: MXU pool, bf16 weights, bf16 gate multiply.
    x_bf = x.astype(jnp.bfloat16)
    ref_bf = _reference(x_bf.astype(jnp.float32),
                        weight.astype(jnp.bfloat16).astype(jnp.float32), bias)
    out_bf = jax.block_until_ready(channel_attention(x_bf, weight, bias))
    assert out_bf.dtype == jnp.bfloat16
    assert jnp.allclose(out_bf.astype(jnp.float32), ref_bf, atol=5e-2, rtol=5e-2), \
        "single-pass bf16 mismatch"

    print("KERNEL_OK")
</pallas_src>

<mosaic_0001>
module attributes {stable_mosaic.version = 11 : i64} {
  func.func @kernel(%arg0: i32, %arg1: memref<1x4x256xf32, #tpu.memory_space<vmem>>, %arg2: memref<4x4xf32, #tpu.memory_space<vmem>>, %arg3: memref<4x1xf32, #tpu.memory_space<vmem>>, %arg4: memref<1x4x256xf32, #tpu.memory_space<vmem>>) attributes {dimension_semantics = [#tpu.dimension_semantics<parallel>], iteration_bounds = array<i64: 2>, scalar_prefetch = 0 : i64, scratch_operands = 0 : i64, tpu.core_type = #tpu.core_type<tc>, window_params = [{transform_indices = @transform_0, window_bounds = array<i64: 1, 4, 256>}, {pipeline_mode = #tpu.pipeline_mode<synchronous>, transform_indices = @transform_1, window_bounds = array<i64: 4, 4>}, {pipeline_mode = #tpu.pipeline_mode<synchronous>, transform_indices = @transform_2, window_bounds = array<i64: 4, 1>}, {transform_indices = @transform_3, window_bounds = array<i64: 1, 4, 256>}]} {
    %c0 = arith.constant 0 : index
    %c0_0 = arith.constant 0 : index
    %c0_1 = arith.constant 0 : index
    %0 = vector.load %arg1[%c0, %c0_0, %c0_1] : memref<1x4x256xf32, #tpu.memory_space<vmem>>, vector<1x4x256xf32>
    %1 = vector.shape_cast %0 : vector<1x4x256xf32> to vector<4x256xf32>
    %cst = arith.constant dense<0.000000e+00> : vector<4xf32>
    %2 = vector.multi_reduction <add>, %1, %cst [1] : vector<4x256xf32> to vector<4xf32>
    %3 = vector.shape_cast %2 : vector<4xf32> to vector<4x1xf32>
    %cst_2 = arith.constant 3.906250e-03 : f32
    %4 = vector.broadcast %cst_2 : f32 to vector<4x1xf32>
    %5 = arith.mulf %3, %4 : vector<4x1xf32>
    %c0_3 = arith.constant 0 : index
    %c0_4 = arith.constant 0 : index
    %6 = vector.load %arg2[%c0_3, %c0_4] : memref<4x4xf32, #tpu.memory_space<vmem>>, vector<4x4xf32>
    %cst_5 = arith.constant dense<0.000000e+00> : vector<4x1xf32>
    %7 = tpu.matmul %6, %5, %cst_5 {dimension_numbers = #tpu.dot_dimension_numbers<[1], [0], [0], [1], [0, 0, 1, 1], [], []>, precision = #tpu.contract_precision<fp32>} : vector<4x4xf32>, vector<4x1xf32>, vector<4x1xf32> -> vector<4x1xf32>
    %c0_6 = arith.constant 0 : index
    %c0_7 = arith.constant 0 : index
    %8 = vector.load %arg3[%c0_6, %c0_7] : memref<4x1xf32, #tpu.memory_space<vmem>>, vector<4x1xf32>
    %9 = arith.addf %7, %8 : vector<4x1xf32>
    %10 = arith.negf %9 : vector<4x1xf32>
    %11 = math.exp %10 : vector<4x1xf32>
    %cst_8 = arith.constant 1.000000e+00 : f32
    %12 = vector.broadcast %cst_8 : f32 to vector<4x1xf32>
    %13 = arith.addf %12, %11 : vector<4x1xf32>
    %14 = arith.divf %12, %13 : vector<4x1xf32>
    %15 = vector.broadcast %14 : vector<4x1xf32> to vector<4x256xf32>
    %16 = arith.mulf %1, %15 : vector<4x256xf32>
    %c0_9 = arith.constant 0 : index
    %c0_10 = arith.constant 0 : index
    %c0_11 = arith.constant 0 : index
    %17 = vector.load %arg4[%c0_9, %c0_10, %c0_11] : memref<1x4x256xf32, #tpu.memory_space<vmem>>, vector<1x4x256xf32>
    %18 = vector.shape_cast %17 : vector<1x4x256xf32> to vector<4x256xf32>
    %19 = vector.shape_cast %16 : vector<4x256xf32> to vector<1x4x256xf32>
    tpu.vector_store %arg4[%c0_9, %c0_10, %c0_11], %19 {strides = array<i32>} : memref<1x4x256xf32, #tpu.memory_space<vmem>>, vector<1x4x256xf32>,
    return
  }
  func.func @transform_0(%arg0: i32) -> (i32, i32, i32) {
    %c0_i32 = arith.constant 0 : i32
    %c0_i32_0 = arith.constant 0 : i32
    %c0_i32_1 = arith.constant 0 : i32
    return %arg0, %c0_i32, %c0_i32_0 : i32, i32, i32
  }
  func.func @transform_1(%arg0: i32) -> (i32, i32) {
    %c0_i32 = arith.constant 0 : i32
    %c0_i32_0 = arith.constant 0 : i32
    %c0_i32_1 = arith.constant 0 : i32
    return %c0_i32, %c0_i32_0 : i32, i32
  }
  func.func @transform_2(%arg0: i32) -> (i32, i32) {
    %c0_i32 = arith.constant 0 : i32
    %c0_i32_0 = arith.constant 0 : i32
    %c0_i32_1 = arith.constant 0 : i32
    return %c0_i32, %c0_i32_0 : i32, i32
  }
  func.func @transform_3(%arg0: i32) -> (i32, i32, i32) {
    %c0_i32 = arith.constant 0 : i32
    %c0_i32_0 = arith.constant 0 : i32
    %c0_i32_1 = arith.constant 0 : i32
    return %arg0, %c0_i32, %c0_i32_0 : i32, i32, i32
  }
}

</mosaic_0001>

<llo_original>
// kernel: tpu_custom_call.1
$region0: #{tpu_custom_call.1}
  #allocation0 [shape = 'u32[]', space=smem, size = 0x4, offset = 0x4, fixed_abs, tag = 'smem constant byte address 0x4 - core index']
  #allocation1 [shape = 'u32[144,128]{1,0:T(1,128)}', space=vmem, size = 0x12000, scoped, tag = 'internal scratch']
  %s0 = inlined_call_operand.hbm [shape: f32[2,4,256], index: 0, kind: input, shape index: {}]
  %s1 = inlined_call_operand.vmem [shape: f32[4,4], index: 1, kind: input, shape index: {}]
  %s2 = inlined_call_operand.vmem [shape: f32[4,1], index: 2, kind: input, shape index: {}]
  %s3 = inlined_call_operand.hbm [shape: f32[2,4,256], index: 3, kind: output, shape index: {}]
  %s4 = sld [smem:[#allocation0]]
  $region49: #{tpu_custom_call.1} parent=0
    _
  %s6 = ssub.s32 1, %s4
  %s7 = scalar_select 0, %s6, %s4
  $region1: #{tpu_custom_call.1} parent=0
    #allocation2 [shape = 'u8[8192]{0}', space=vmem, size = 0x2000, scoped, tag = 'input window, operand 0']
    #allocation3 [shape = 's32[2]{0}', space=sflag, size = 0x8, scoped, tag = 'scoped memory for tpu_custom_call.1']
    #allocation4 [shape = 's32[2]{0}', space=sflag, size = 0x8, scoped, tag = 'scoped memory for tpu_custom_call.1']
    #allocation5 [shape = 'u8[8192]{0}', space=vmem, size = 0x2000, scoped, tag = 'output window, operand 0']
    %8 = vsyncpa [#allocation3], 0
    %s9 = scalar_lea.sflag [#allocation3], 1
    %10 = vsyncpa %s9, 0
    %11 = vsyncpa [#allocation4], 0
    %s12 = scalar_lea.sflag [#allocation4], 1
    %13 = vsyncpa %s12, 0
    loop: start=0, step=1, limit=4
    $region2: #{tpu_custom_call.1} parent=1 // loop_pre_header
      _
    $region3: #{tpu_custom_call.1} parent=1 // loop_header
      %s15 = sphi 0, %s19
      %p16 = scmp.ge.s32.totalorder %s15, 4
      %s25 = sphi 0, %s27
      %s28 = sphi 0, %s25
      %s29 = sphi 0, %s28
      %s45 = sphi 0, %s29
      %s49 = sphi 0, %s49
      %s51 = sphi 0, %s49
      %s52 = sphi 0, %s51
      %s66 = sphi 0, %s52
      %s70 = sphi 0, %s70
      %s72 = sphi 0, %s70
      %s73 = sphi 0, %s72
      %s87 = sphi 0, %s73
      %s93 = sphi 0, %s95
      %s96 = sphi 0, %s93
      %s97 = sphi 0, %s96
      %s113 = sphi 0, %s97
    $region4: #{tpu_custom_call.1} parent=1 // loop_header_branch
      %18 = sbr.rel (%p16) target = $region8
    $region5: #{tpu_custom_call.1} parent=1 // loop_body
      %s20 = ssub.s32 %s15, 1
      %s21 = ssub.s32 %s15, 2
      %s22 = sadd.s32 %s15, 1
      %s23 = ssub.s32 %s15, %s22
      %p24 = scmp.eq.s32.totalorder %s23, 0
      %s26 = sadd.s32 %s25, 1
      %s27 = scalar_select %p24, %s25, %s26
      %p30 = pneg %p24
      %p31 = scmp.eq.s32.totalorder %s15, 1
      %p32 = por %p30, %p31
      %p33 = scmp.ne.s32.totalorder %s25, %s28
      %p34 = scmp.eq.s32.totalorder %s15, 0
      %p35 = por %p33, %p34
      %p36 = scmp.ne.s32.totalorder %s25, %s28
      %p37 = scmp.eq.s32.totalorder %s20, 1
      %p38 = por %p36, %p37
      %p39 = scmp.ne.s32.totalorder %s28, %s29
      %p40 = scmp.eq.s32.totalorder %s20, 0
      %p41 = por %p39, %p40
      %p42 = scmp.ne.s32.totalorder %s28, %s29
      %p43 = scmp.eq.s32.totalorder %s21, 1
      %p44 = por %p42, %p43
      %p46 = scmp.ne.s32.totalorder %s29, %s45
      %p47 = scmp.eq.s32.totalorder %s21, 0
      %p48 = por %p46, %p47
      %s50 = sadd.s32 %s49, 1
      %p53 = scmp.eq.s32.totalorder %s15, 1
      %p54 = scmp.ne.s32.totalorder %s49, %s51
      %p55 = scmp.eq.s32.totalorder %s15, 0
      %p56 = por %p54, %p55
      %p57 = scmp.ne.s32.totalorder %s49, %s51
      %p58 = scmp.eq.s32.totalorder %s20, 1
      %p59 = por %p57, %p58
      %p60 = scmp.ne.s32.totalorder %s51, %s52
      %p61 = scmp.eq.s32.totalorder %s20, 0
      %p62 = por %p60, %p61
      %p63 = scmp.ne.s32.totalorder %s51, %s52
      %p64 = scmp.eq.s32.totalorder %s21, 1
      %p65 = por %p63, %p64
      %p67 = scmp.ne.s32.totalorder %s52, %s66
      %p68 = scmp.eq.s32.totalorder %s21, 0
      %p69 = por %p67, %p68
      %s71 = sadd.s32 %s70, 1
      %p74 = scmp.eq.s32.totalorder %s15, 1
      %p75 = scmp.ne.s32.totalorder %s70, %s72
      %p76 = scmp.eq.s32.totalorder %s15, 0
      %p77 = por %p75, %p76
      %p78 = scmp.ne.s32.totalorder %s70, %s72
      %p79 = scmp.eq.s32.totalorder %s20, 1
      %p80 = por %p78, %p79
      %p81 = scmp.ne.s32.totalorder %s72, %s73
      %p82 = scmp.eq.s32.totalorder %s20, 0
      %p83 = por %p81, %p82
      %p84 = scmp.ne.s32.totalorder %s72, %s73
      %p85 = scmp.eq.s32.totalorder %s21, 1
      %p86 = por %p84, %p85
      %p88 = scmp.ne.s32.totalorder %s73, %s87
      %p89 = scmp.eq.s32.totalorder %s21, 0
      %p90 = por %p88, %p89
      %s91 = ssub.s32 %s15, %s22
      %p92 = scmp.eq.s32.totalorder %s91, 0
      %s94 = sadd.s32 %s93, 1
      %s95 = scalar_select %p92, %s93, %s94
      %p98 = pneg %p92
      %p99 = scmp.eq.s32.totalorder %s15, 1
      %p100 = por %p98, %p99
      %p101 = scmp.ne.s32.totalorder %s93, %s96
      %p102 = scmp.eq.s32.totalorder %s15, 0
      %p103 = por %p101, %p102
      %p104 = scmp.ne.s32.totalorder %s93, %s96
      %p105 = scmp.eq.s32.totalorder %s20, 1
      %p106 = por %p104, %p105
      %p107 = scmp.ne.s32.totalorder %s96, %s97
      %p108 = scmp.eq.s32.totalorder %s20, 0
      %p109 = por %p107, %p108
      %p110 = scmp.ne.s32.totalorder %s96, %s97
      %p111 = scmp.eq.s32.totalorder %s21, 1
      %p112 = por %p110, %p111
      %p114 = scmp.ne.s32.totalorder %s97, %s113
      %p115 = scmp.eq.s32.totalorder %s21, 0
      %p116 = por %p114, %p115
      %p117 = scmp.le.s32.totalorder 1, %s15
      %p118 = scmp.lt.s32.totalorder %s15, 3
      %p119 = pnand %p117, %p118
      %p120 = pneg %p119
      // Predicated region
      $region9: #{tpu_custom_call.1} parent=5 // pred_check
        _
      $region10: #{tpu_custom_call.1} parent=5 // pred_check_branch
        %122 = sbr.rel (%p119) target = $region12
      $region11: #{tpu_custom_call.1} parent=5 // pred_region
        %s123 = ssub.s32 %s15, 1
        // Predicated region
        $region13: #{tpu_custom_call.1} parent=11 // pred_check
          %p124 = pneg %p62
        $region14: #{tpu_custom_call.1} parent=11 // pred_check_branch
          %126 = sbr.rel (%p124) target = $region16
        $region15: #{tpu_custom_call.1} parent=11 // pred_region
          _
        $region16: #{tpu_custom_call.1} parent=11 // pred_fallthru
          _
        // Predicated region
        $region17: #{tpu_custom_call.1} parent=11 // pred_check
          %p127 = pneg %p83
        $region18: #{tpu_custom_call.1} parent=11 // pred_check_branch
          %129 = sbr.rel (%p127) target = $region20
        $region19: #{tpu_custom_call.1} parent=11 // pred_region
          _
        $region20: #{tpu_custom_call.1} parent=11 // pred_fallthru
          _
      $region12: #{tpu_custom_call.1} parent=5 // pred_fallthru
        _
      %p130 = scmp.lt.s32.totalorder %s15, 2
      // Predicated region
      $region21: #{tpu_custom_call.1} parent=5 // pred_check
        %p131 = pneg %p130
      $region22: #{tpu_custom_call.1} parent=5 // pred_check_branch
        %133 = sbr.rel (%p131) target = $region24
      $region23: #{tpu_custom_call.1} parent=5 // pred_region
        // Predicated region
        $region25: #{tpu_custom_call.1} parent=23 // pred_check
          %p134 = pneg %p35
        $region26: #{tpu_custom_call.1} parent=23 // pred_check_branch
          %136 = sbr.rel (%p134) target = $region28
        $region27: #{tpu_custom_call.1} parent=23 // pred_region
          %s137 = sand.u32 %s25, 1
          %s138 = scalar_lea.sflag [#allocation3], %s137
          %s139 = sand.u32 %s25, 1
          %s140 = smul.addr %s139, 8
          %s141 = scalar_lea.vmem [#allocation2], %s140
          %s143 = ssub.s32 128, 128
          %144 = vsyncadd %s138, %s143
          %s145 = smul.addr %s15, 2
          %s146 = smul.addr %s145, 64
          %s147 = scalar_lea.hbm %s0, %s146
          %s149 = sshll.u32 %s141, 4
          %s150 = int_to_ptr.vmem [resolvable:$true] %s149
          %152 = dma.hbm_to_vmem [thread:$0]  %s147, 128, %s150, %s138
        $region28: #{tpu_custom_call.1} parent=23 // pred_fallthru
          _
      $region24: #{tpu_custom_call.1} parent=5 // pred_fallthru
        _
      %p153 = scmp.le.s32.totalorder 1, %s15
      %p154 = scmp.lt.s32.totalorder %s15, 3
      %p155 = pnand %p153, %p154
      %p156 = pneg %p155
      // Predicated region
      $region29: #{tpu_custom_call.1} parent=5 // pred_check
        _
      $region30: #{tpu_custom_call.1} parent=5 // pred_check_branch
        %158 = sbr.rel (%p155) target = $region32
      $region31: #{tpu_custom_call.1} parent=5 // pred_region
        %s159 = ssub.s32 %s15, 1
        %s160 = sand.u32 %s28, 1
        %s161 = scalar_lea.sflag [#allocation3], %s160
        %s162 = sand.u32 %s28, 1
        %s163 = smul.addr %s162, 8
        %s164 = scalar_lea.vmem [#allocation2], %s163
        // Predicated region
        $region33: #{tpu_custom_call.1} parent=31 // pred_check
          %p165 = pneg %p41
        $region34: #{tpu_custom_call.1} parent=31 // pred_check_branch
          %167 = sbr.rel (%p165) target = $region36
        $region35: #{tpu_custom_call.1} parent=31 // pred_region
          %168 = dma.done %s161, 128
        $region36: #{tpu_custom_call.1} parent=31 // pred_fallthru
          _
        %s169 = sand.u32 %s28, 1
        %s170 = scalar_lea.sflag [#allocation3], %s169
        %s171 = sand.u32 %s28, 1
        %s172 = smul.addr %s171, 8
        %s173 = scalar_lea.vmem [#allocation2], %s172
        %p174 = pneg %p41
        %p175 = pneg %p38
        %p176 = pneg %p62
        %p177 = pneg %p59
        %p178 = pneg %p83
        %p179 = pneg %p80
        %p180 = pneg %p109
        %p181 = pneg %p106
        %s182 = sand.u32 %s96, 1
        %s183 = scalar_lea.sflag [#allocation4], %s182
        %s184 = sand.u32 %s96, 1
        %s185 = smul.addr %s184, 8
        %s186 = scalar_lea.vmem [#allocation5], %s185
        %v187 = vld [vmem:[%s164] sm:$0xff]
        %v189 = vcombine.high %v187, %v187
        %vm191 = vcmask 1043456
        %v192 = vsel %vm191, %v187, 0.0
        %v193 = vsel %vm191, %v189, 0.0
        %v194 = vadd.f32 %v192, %v193
        %195 = vadd.xlane.f32.xlu0 %v194
        %v196 = vpop.xlane.xlu0 %195
        %v197 = vmul.f32 %v196, 0.00390625
        %v198 = vld [vmem:[%s1] sm:$0xf]
        %v199 = vld [vmem:[%s2] sm:$0xf]
        %vm200 = vcmask 31744
        %v202 = vsel %vm200, %v198, 0
        %v205 = vsel %vm191, %v197, 0
        %207 = vmatprep.subr.mxu0 0.0
        %208 = vmatpush1.msra.mxu0 0.0
        %209 = vmatprep.subr.mxu0 0.0
        %210 = vmatpush1.msra.mxu0 0.0
        %211 = vmatprep.subr.mxu0 0.0
        %212 = vmatpush1.msra.mxu0 0.0
        %213 = vmatprep.subr.mxu0 0.0
        %214 = vmatpush1.msra.mxu0 0.0
        %215 = vmatprep.subr.mxu0 0.0
        %216 = vmatpush1.msra.mxu0 0.0
        %217 = vmatprep.subr.mxu0 0.0
        %218 = vmatpush1.msra.mxu0 0.0
        %219 = vmatprep.subr.mxu0 0.0
        %220 = vmatpush1.msra.mxu0 0.0
        %221 = vmatprep.subr.mxu0 0.0
        %222 = vmatpush1.msra.mxu0 0.0
        %223 = vmatprep.subr.mxu0 0.0
        %224 = vmatpush1.msra.mxu0 0.0
        %225 = vmatprep.subr.mxu0 0.0
        %226 = vmatpush1.msra.mxu0 0.0
        %227 = vmatprep.subr.mxu0 0.0
        %228 = vmatpush1.msra.mxu0 0.0
        %229 = vmatprep.subr.mxu0 0.0
        %230 = vmatpush1.msra.mxu0 0.0
        %231 = vmatprep.subr.mxu0 0.0
        %232 = vmatpush1.msra.mxu0 0.0
        %233 = vmatprep.subr.mxu0 0.0
        %234 = vmatpush1.msra.mxu0 0.0
        %235 = vmatprep.subr.mxu0 0.0
        %236 = vmatpush1.msra.mxu0 0.0
        %237 = vmatprep.subr.mxu0 0.0
        %v238 = vand.u32 %v205, 4294901760
        %239 = vmatpush1.msra.mxu0 %v238
        %240 = vmatprep.subr.mxu0 0.0
        %241 = vmatpush2.msra.mxu0 0.0
        %242 = vmatprep.subr.mxu0 0.0
        %243 = vmatpush2.msra.mxu0 0.0
        %244 = vmatprep.subr.mxu0 0.0
        %245 = vmatpush2.msra.mxu0 0.0
        %246 = vmatprep.subr.mxu0 0.0
        %247 = vmatpush2.msra.mxu0 0.0
        %248 = vmatprep.subr.mxu0 0.0
        %249 = vmatpush2.msra.mxu0 0.0
        %250 = vmatprep.subr.mxu0 0.0
        %251 = vmatpush2.msra.mxu0 0.0
        %252 = vmatprep.subr.mxu0 0.0
        %253 = vmatpush2.msra.mxu0 0.0
        %254 = vmatprep.subr.mxu0 0.0
        %255 = vmatpush2.msra.mxu0 0.0
        %256 = vmatprep.subr.mxu0 0.0
        %257 = vmatpush2.msra.mxu0 0.0
        %258 = vmatprep.subr.mxu0 0.0
        %259 = vmatpush2.msra.mxu0 0.0
        %260 = vmatprep.subr.mxu0 0.0
        %261 = vmatpush2.msra.mxu0 0.0
        %262 = vmatprep.subr.mxu0 0.0
        %263 = vmatpush2.msra.mxu0 0.0
        %264 = vmatprep.subr.mxu0 0.0
        %265 = vmatpush2.msra.mxu0 0.0
        %266 = vmatprep.subr.mxu0 0.0
        %267 = vmatpush2.msra.mxu0 0.0
        %268 = vmatprep.subr.mxu0 0.0
        %269 = vmatpush2.msra.mxu0 0.0
        %270 = vmatprep.subr.mxu0 0.0
        %271 = vmatpush2.msra.mxu0 0.0
        %272 = vmatprep.mubr.f32.mxu0 0.0
        %v273 = vand.u32 %v202, 4294901760
        %v274 = vsub.f32 %v202, %v273
        %v275 = vand.u32 %v274, 4294901760
        %v276 = vsub.f32 %v274, %v275
        %v277 = vand.u32 %v276, 4294901760
        %278 = vmatmul.mubr.f32.gmra.mxu0 %v277
        %v279 = vpop.f32.mrf.mxu0
        %v280 = vadd.f32 %v199, %v279
        %v281 = vpop.f32.mrf.mxu0
        %282 = vdwg.mxu0
        %283 = vmatprep.subr.mxu0 0.0
        %284 = vmatpush1.msra.mxu0 0.0
        %285 = vmatprep.subr.mxu0 0.0
        %286 = vmatpush1.msra.mxu0 0.0
        %287 = vmatprep.subr.mxu0 0.0
        %288 = vmatpush1.msra.mxu0 0.0
        %289 = vmatprep.subr.mxu0 0.0
        %290 = vmatpush1.msra.mxu0 0.0
        %291 = vmatprep.subr.mxu0 0.0
        %292 = vmatpush1.msra.mxu0 0.0
        %293 = vmatprep.subr.mxu0 0.0
        %294 = vmatpush1.msra.mxu0 0.0
        %295 = vmatprep.subr.mxu0 0.0
        %296 = vmatpush1.msra.mxu0 0.0
        %297 = vmatprep.subr.mxu0 0.0
        %298 = vmatpush1.msra.mxu0 0.0
        %299 = vmatprep.subr.mxu0 0.0
        %300 = vmatpush1.msra.mxu0 0.0
        %301 = vmatprep.subr.mxu0 0.0
        %302 = vmatpush1.msra.mxu0 0.0
        %303 = vmatprep.subr.mxu0 0.0
        %304 = vmatpush1.msra.mxu0 0.0
        %305 = vmatprep.subr.mxu0 0.0
        %306 = vmatpush1.msra.mxu0 0.0
        %307 = vmatprep.subr.mxu0 0.0
        %308 = vmatpush1.msra.mxu0 0.0
        %309 = vmatprep.subr.mxu0 0.0
        %310 = vmatpush1.msra.mxu0 0.0
        %311 = vmatprep.subr.mxu0 0.0
        %312 = vmatpush1.msra.mxu0 0.0
        %313 = vmatprep.subr.mxu0 0.0
        %v314 = vand.u32 %v205, 4294901760
        %v315 = vsub.f32 %v205, %v314
        %v316 = vand.u32 %v315, 4294901760
        %v317 = vsub.f32 %v315, %v316
        %v318 = vand.u32 %v317, 4294901760
        %319 = vmatpush1.msra.mxu0 %v318
        %320 = vmatprep.subr.mxu0 0.0
        %321 = vmatpush2.msra.mxu0 0.0
        %322 = vmatprep.subr.mxu0 0.0
        %323 = vmatpush2.msra.mxu0 0.0
        %324 = vmatprep.subr.mxu0 0.0
        %325 = vmatpush2.msra.mxu0 0.0
        %326 = vmatprep.subr.mxu0 0.0
        %327 = vmatpush2.msra.mxu0 0.0
        %328 = vmatprep.subr.mxu0 0.0
        %329 = vmatpush2.msra.mxu0 0.0
        %330 = vmatprep.subr.mxu0 0.0
        %331 = vmatpush2.msra.mxu0 0.0
        %332 = vmatprep.subr.mxu0 0.0
        %333 = vmatpush2.msra.mxu0 0.0
        %334 = vmatprep.subr.mxu0 0.0
        %335 = vmatpush2.msra.mxu0 0.0
        %336 = vmatprep.subr.mxu0 0.0
        %337 = vmatpush2.msra.mxu0 0.0
        %338 = vmatprep.subr.mxu0 0.0
        %339 = vmatpush2.msra.mxu0 0.0
        %340 = vmatprep.subr.mxu0 0.0
        %341 = vmatpush2.msra.mxu0 0.0
        %342 = vmatprep.subr.mxu0 0.0
        %343 = vmatpush2.msra.mxu0 0.0
        %344 = vmatprep.subr.mxu0 0.0
        %345 = vmatpush2.msra.mxu0 0.0
        %346 = vmatprep.subr.mxu0 0.0
        %347 = vmatpush2.msra.mxu0 0.0
        %348 = vmatprep.subr.mxu0 0.0
        %349 = vmatpush2.msra.mxu0 0.0
        %350 = vmatprep.subr.mxu0 0.0
        %351 = vmatpush2.msra.mxu0 0.0
        %352 = vmatprep.mubr.f32.mxu0 0.0
        %v353 = vand.u32 %v202, 4294901760
        %354 = vmatmul.mubr.f32.gmra.mxu0 %v353
        %v355 = vpop.f32.mrf.mxu0
        %v356 = vadd.f32 %v280, %v355
        %v357 = vpop.f32.mrf.mxu0
        %358 = vdwg.mxu0
        %359 = vmatprep.subr.mxu0 0.0
        %360 = vmatpush1.msra.mxu0 0.0
        %361 = vmatprep.subr.mxu0 0.0
        %362 = vmatpush1.msra.mxu0 0.0
        %363 = vmatprep.subr.mxu0 0.0
        %364 = vmatpush1.msra.mxu0 0.0
        %365 = vmatprep.subr.mxu0 0.0
        %366 = vmatpush1.msra.mxu0 0.0
        %367 = vmatprep.subr.mxu0 0.0
        %368 = vmatpush1.msra.mxu0 0.0
        %369 = vmatprep.subr.mxu0 0.0
        %370 = vmatpush1.msra.mxu0 0.0
        %371 = vmatprep.subr.mxu0 0.0
        %372 = vmatpush1.msra.mxu0 0.0
        %373 = vmatprep.subr.mxu0 0.0
        %374 = vmatpush1.msra.mxu0 0.0
        %375 = vmatprep.subr.mxu0 0.0
        %376 = vmatpush1.msra.mxu0 0.0
        %377 = vmatprep.subr.mxu0 0.0
        %378 = vmatpush1.msra.mxu0 0.0
        %379 = vmatprep.subr.mxu0 0.0
        %380 = vmatpush1.msra.mxu0 0.0
        %381 = vmatprep.subr.mxu0 0.0
        %382 = vmatpush1.msra.mxu0 0.0
        %383 = vmatprep.subr.mxu0 0.0
        %384 = vmatpush1.msra.mxu0 0.0
        %385 = vmatprep.subr.mxu0 0.0
        %386 = vmatpush1.msra.mxu0 0.0
        %387 = vmatprep.subr.mxu0 0.0
        %388 = vmatpush1.msra.mxu0 0.0
        %389 = vmatprep.subr.mxu0 0.0
        %v390 = vand.u32 %v205, 4294901760
        %v391 = vsub.f32 %v205, %v390
        %392 = vmatpush1.msra.mxu0 %v391
        %393 = vmatprep.subr.mxu0 0.0
        %394 = vmatpush2.msra.mxu0 0.0
        %395 = vmatprep.subr.mxu0 0.0
        %396 = vmatpush2.msra.mxu0 0.0
        %397 = vmatprep.subr.mxu0 0.0
        %398 = vmatpush2.msra.mxu0 0.0
        %399 = vmatprep.subr.mxu0 0.0
        %400 = vmatpush2.msra.mxu0 0.0
        %401 = vmatprep.subr.mxu0 0.0
        %402 = vmatpush2.msra.mxu0 0.0
        %403 = vmatprep.subr.mxu0 0.0
        %404 = vmatpush2.msra.mxu0 0.0
        %405 = vmatprep.subr.mxu0 0.0
        %406 = vmatpush2.msra.mxu0 0.0
        %407 = vmatprep.subr.mxu0 0.0
        %408 = vmatpush2.msra.mxu0 0.0
        %409 = vmatprep.subr.mxu0 0.0
        %410 = vmatpush2.msra.mxu0 0.0
        %411 = vmatprep.subr.mxu0 0.0
        %412 = vmatpush2.msra.mxu0 0.0
        %413 = vmatprep.subr.mxu0 0.0
        %414 = vmatpush2.msra.mxu0 0.0
        %415 = vmatprep.subr.mxu0 0.0
        %416 = vmatpush2.msra.mxu0 0.0
        %417 = vmatprep.subr.mxu0 0.0
        %418 = vmatpush2.msra.mxu0 0.0
        %419 = vmatprep.subr.mxu0 0.0
        %420 = vmatpush2.msra.mxu0 0.0
        %421 = vmatprep.subr.mxu0 0.0
        %422 = vmatpush2.msra.mxu0 0.0
        %423 = vmatprep.subr.mxu0 0.0
        %424 = vmatpush2.msra.mxu0 0.0
        %425 = vmatprep.mubr.f32.mxu0 0.0
        %v426 = vand.u32 %v202, 4294901760
        %v427 = vsub.f32 %v202, %v426
        %428 = vmatmul.mubr.f32.gmra.mxu0 %v427
        %v429 = vpop.f32.mrf.mxu0
        %v430 = vadd.f32 %v356, %v429
        %v431 = vpop.f32.mrf.mxu0
        %432 = vdwg.mxu0
        %433 = vmatprep.subr.mxu0 0.0
        %434 = vmatpush1.msra.mxu0 0.0
        %435 = vmatprep.subr.mxu0 0.0
        %436 = vmatpush1.msra.mxu0 0.0
        %437 = vmatprep.subr.mxu0 0.0
        %438 = vmatpush1.msra.mxu0 0.0
        %439 = vmatprep.subr.mxu0 0.0
        %440 = vmatpush1.msra.mxu0 0.0
        %441 = vmatprep.subr.mxu0 0.0
        %442 = vmatpush1.msra.mxu0 0.0
        %443 = vmatprep.subr.mxu0 0.0
        %444 = vmatpush1.msra.mxu0 0.0
        %445 = vmatprep.subr.mxu0 0.0
        %446 = vmatpush1.msra.mxu0 0.0
        %447 = vmatprep.subr.mxu0 0.0
        %448 = vmatpush1.msra.mxu0 0.0
        %449 = vmatprep.subr.mxu0 0.0
        %450 = vmatpush1.msra.mxu0 0.0
        %451 = vmatprep.subr.mxu0 0.0
        %452 = vmatpush1.msra.mxu0 0.0
        %453 = vmatprep.subr.mxu0 0.0
        %454 = vmatpush1.msra.mxu0 0.0
        %455 = vmatprep.subr.mxu0 0.0
        %456 = vmatpush1.msra.mxu0 0.0
        %457 = vmatprep.subr.mxu0 0.0
        %458 = vmatpush1.msra.mxu0 0.0
        %459 = vmatprep.subr.mxu0 0.0
        %460 = vmatpush1.msra.mxu0 0.0
        %461 = vmatprep.subr.mxu0 0.0
        %462 = vmatpush1.msra.mxu0 0.0
        %463 = vmatprep.subr.mxu0 0.0
        %v464 = vand.u32 %v205, 4294901760
        %465 = vmatpush1.msra.mxu0 %v464
        %466 = vmatprep.subr.mxu0 0.0
        %467 = vmatpush2.msra.mxu0 0.0
        %468 = vmatprep.subr.mxu0 0.0
        %469 = vmatpush2.msra.mxu0 0.0
        %470 = vmatprep.subr.mxu0 0.0
        %471 = vmatpush2.msra.mxu0 0.0
        %472 = vmatprep.subr.mxu0 0.0
        %473 = vmatpush2.msra.mxu0 0.0
        %474 = vmatprep.subr.mxu0 0.0
        %475 = vmatpush2.msra.mxu0 0.0
        %476 = vmatprep.subr.mxu0 0.0
        %477 = vmatpush2.msra.mxu0 0.0
        %478 = vmatprep.subr.mxu0 0.0
        %479 = vmatpush2.msra.mxu0 0.0
        %480 = vmatprep.subr.mxu0 0.0
        %481 = vmatpush2.msra.mxu0 0.0
        %482 = vmatprep.subr.mxu0 0.0
        %483 = vmatpush2.msra.mxu0 0.0
        %484 = vmatprep.subr.mxu0 0.0
        %485 = vmatpush2.msra.mxu0 0.0
        %486 = vmatprep.subr.mxu0 0.0
        %487 = vmatpush2.msra.mxu0 0.0
        %488 = vmatprep.subr.mxu0 0.0
        %489 = vmatpush2.msra.mxu0 0.0
        %490 = vmatprep.subr.mxu0 0.0
        %491 = vmatpush2.msra.mxu0 0.0
        %492 = vmatprep.subr.mxu0 0.0
        %493 = vmatpush2.msra.mxu0 0.0
        %494 = vmatprep.subr.mxu0 0.0
        %495 = vmatpush2.msra.mxu0 0.0
        %496 = vmatprep.subr.mxu0 0.0
        %497 = vmatpush2.msra.mxu0 0.0
        %498 = vmatprep.mubr.f32.mxu0 0.0
        %v499 = vand.u32 %v202, 4294901760
        %v500 = vsub.f32 %v202, %v499
        %v501 = vand.u32 %v500, 4294901760
        %502 = vmatmul.mubr.f32.gmra.mxu0 %v501
        %v503 = vpop.f32.mrf.mxu0
        %v504 = vadd.f32 %v430, %v503
        %v505 = vpop.f32.mrf.mxu0
        %506 = vdwg.mxu0
        %507 = vmatprep.subr.mxu0 0.0
        %508 = vmatpush1.msra.mxu0 0.0
        %509 = vmatprep.subr.mxu0 0.0
        %510 = vmatpush1.msra.mxu0 0.0
        %511 = vmatprep.subr.mxu0 0.0
        %512 = vmatpush1.msra.mxu0 0.0
        %513 = vmatprep.subr.mxu0 0.0
        %514 = vmatpush1.msra.mxu0 0.0
        %515 = vmatprep.subr.mxu0 0.0
        %516 = vmatpush1.msra.mxu0 0.0
        %517 = vmatprep.subr.mxu0 0.0
        %518 = vmatpush1.msra.mxu0 0.0
        %519 = vmatprep.subr.mxu0 0.0
        %520 = vmatpush1.msra.mxu0 0.0
        %521 = vmatprep.subr.mxu0 0.0
        %522 = vmatpush1.msra.mxu0 0.0
        %523 = vmatprep.subr.mxu0 0.0
        %524 = vmatpush1.msra.mxu0 0.0
        %525 = vmatprep.subr.mxu0 0.0
        %526 = vmatpush1.msra.mxu0 0.0
        %527 = vmatprep.subr.mxu0 0.0
        %528 = vmatpush1.msra.mxu0 0.0
        %529 = vmatprep.subr.mxu0 0.0
        %530 = vmatpush1.msra.mxu0 0.0
        %531 = vmatprep.subr.mxu0 0.0
        %532 = vmatpush1.msra.mxu0 0.0
        %533 = vmatprep.subr.mxu0 0.0
        %534 = vmatpush1.msra.mxu0 0.0
        %535 = vmatprep.subr.mxu0 0.0
        %536 = vmatpush1.msra.mxu0 0.0
        %537 = vmatprep.subr.mxu0 0.0
        %v538 = vand.u32 %v205, 4294901760
        %v539 = vsub.f32 %v205, %v538
        %v540 = vand.u32 %v539, 4294901760
        %541 = vmatpush1.msra.mxu0 %v540
        %542 = vmatprep.subr.mxu0 0.0
        %543 = vmatpush2.msra.mxu0 0.0
        %544 = vmatprep.subr.mxu0 0.0
        %545 = vmatpush2.msra.mxu0 0.0
        %546 = vmatprep.subr.mxu0 0.0
        %547 = vmatpush2.msra.mxu0 0.0
        %548 = vmatprep.subr.mxu0 0.0
        %549 = vmatpush2.msra.mxu0 0.0
        %550 = vmatprep.subr.mxu0 0.0
        %551 = vmatpush2.msra.mxu0 0.0
        %552 = vmatprep.subr.mxu0 0.0
        %553 = vmatpush2.msra.mxu0 0.0
        %554 = vmatprep.subr.mxu0 0.0
        %555 = vmatpush2.msra.mxu0 0.0
        %556 = vmatprep.subr.mxu0 0.0
        %557 = vmatpush2.msra.mxu0 0.0
        %558 = vmatprep.subr.mxu0 0.0
        %559 = vmatpush2.msra.mxu0 0.0
        %560 = vmatprep.subr.mxu0 0.0
        %561 = vmatpush2.msra.mxu0 0.0
        %562 = vmatprep.subr.mxu0 0.0
        %563 = vmatpush2.msra.mxu0 0.0
        %564 = vmatprep.subr.mxu0 0.0
        %565 = vmatpush2.msra.mxu0 0.0
        %566 = vmatprep.subr.mxu0 0.0
        %567 = vmatpush2.msra.mxu0 0.0
        %568 = vmatprep.subr.mxu0 0.0
        %569 = vmatpush2.msra.mxu0 0.0
        %570 = vmatprep.subr.mxu0 0.0
        %571 = vmatpush2.msra.mxu0 0.0
        %572 = vmatprep.subr.mxu0 0.0
        %573 = vmatpush2.msra.mxu0 0.0
        %574 = vmatprep.mubr.f32.mxu0 0.0
        %v575 = vand.u32 %v202, 4294901760
        %576 = vmatmul.mubr.f32.gmra.mxu0 %v575
        %v577 = vpop.f32.mrf.mxu0
        %v578 = vadd.f32 %v504, %v577
        %v579 = vpop.f32.mrf.mxu0
        %580 = vdwg.mxu0
        %581 = vmatprep.subr.mxu0 0.0
        %582 = vmatpush1.msra.mxu0 0.0
        %583 = vmatprep.subr.mxu0 0.0
        %584 = vmatpush1.msra.mxu0 0.0
        %585 = vmatprep.subr.mxu0 0.0
        %586 = vmatpush1.msra.mxu0 0.0
        %587 = vmatprep.subr.mxu0 0.0
        %588 = vmatpush1.msra.mxu0 0.0
        %589 = vmatprep.subr.mxu0 0.0
        %590 = vmatpush1.msra.mxu0 0.0
        %591 = vmatprep.subr.mxu0 0.0
        %592 = vmatpush1.msra.mxu0 0.0
        %593 = vmatprep.subr.mxu0 0.0
        %594 = vmatpush1.msra.mxu0 0.0
        %595 = vmatprep.subr.mxu0 0.0
        %596 = vmatpush1.msra.mxu0 0.0
        %597 = vmatprep.subr.mxu0 0.0
        %598 = vmatpush1.msra.mxu0 0.0
        %599 = vmatprep.subr.mxu0 0.0
        %600 = vmatpush1.msra.mxu0 0.0
        %601 = vmatprep.subr.mxu0 0.0
        %602 = vmatpush1.msra.mxu0 0.0
        %603 = vmatprep.subr.mxu0 0.0
        %604 = vmatpush1.msra.mxu0 0.0
        %605 = vmatprep.subr.mxu0 0.0
        %606 = vmatpush1.msra.mxu0 0.0
        %607 = vmatprep.subr.mxu0 0.0
        %608 = vmatpush1.msra.mxu0 0.0
        %609 = vmatprep.subr.mxu0 0.0
        %610 = vmatpush1.msra.mxu0 0.0
        %611 = vmatprep.subr.mxu0 0.0
        %v612 = vand.u32 %v205, 4294901760
        %613 = vmatpush1.msra.mxu0 %v612
        %614 = vmatprep.subr.mxu0 0.0
        %615 = vmatpush2.msra.mxu0 0.0
        %616 = vmatprep.subr.mxu0 0.0
        %617 = vmatpush2.msra.mxu0 0.0
        %618 = vmatprep.subr.mxu0 0.0
        %619 = vmatpush2.msra.mxu0 0.0
        %620 = vmatprep.subr.mxu0 0.0
        %621 = vmatpush2.msra.mxu0 0.0
        %622 = vmatprep.subr.mxu0 0.0
        %623 = vmatpush2.msra.mxu0 0.0
        %624 = vmatprep.subr.mxu0 0.0
        %625 = vmatpush2.msra.mxu0 0.0
        %626 = vmatprep.subr.mxu0 0.0
        %627 = vmatpush2.msra.mxu0 0.0
        %628 = vmatprep.subr.mxu0 0.0
        %629 = vmatpush2.msra.mxu0 0.0
        %630 = vmatprep.subr.mxu0 0.0
        %631 = vmatpush2.msra.mxu0 0.0
        %632 = vmatprep.subr.mxu0 0.0
        %633 = vmatpush2.msra.mxu0 0.0
        %634 = vmatprep.subr.mxu0 0.0
        %635 = vmatpush2.msra.mxu0 0.0
        %636 = vmatprep.subr.mxu0 0.0
        %637 = vmatpush2.msra.mxu0 0.0
        %638 = vmatprep.subr.mxu0 0.0
        %639 = vmatpush2.msra.mxu0 0.0
        %640 = vmatprep.subr.mxu0 0.0
        %641 = vmatpush2.msra.mxu0 0.0
        %642 = vmatprep.subr.mxu0 0.0
        %643 = vmatpush2.msra.mxu0 0.0
        %644 = vmatprep.subr.mxu0 0.0
        %645 = vmatpush2.msra.mxu0 0.0
        %646 = vmatprep.mubr.f32.mxu0 0.0
        %v647 = vand.u32 %v202, 4294901760
        %648 = vmatmul.mubr.f32.gmra.mxu0 %v647
        %v649 = vpop.f32.mrf.mxu0
        %v650 = vadd.f32 %v578, %v649
        %v651 = vpop.f32.mrf.mxu0
        %652 = vdwg.mxu0
        %v653 = vxor.u32 %v650, 2147483648
        %v654 = vmul.f32 %v653, 1.442695
        %v655 = vpow.pop %v654
        %v656 = vadd.f32 %v655, 1.0
        %v657 = vrcp.pop %v656
        %v658 = vmul.f32 1.0, %v657
        %660 = vset.pattern.permute.xlu0 0
        %661 = vperm.xlu0 %660, %v658
        %v662 = vpop.permute.xlu0 %661
        %v664 = vunpack.c.l.s4 839922192
        %v665 = vunpack.c.0.s8 %v664
        %v666 = vlaneseq
        %v667 = vshrl.u32 %v666, 7
        %v668 = vsub.s32 %v665, %v667
        %v669 = vrot.slane %v662, %v668
        %v671 = vmul.f32 %v187, %v669
        %672 = vst [vmem:[%s186] sm:$0xff] %v671
        %s673 = sand.u32 %s96, 1
        %s674 = scalar_lea.sflag [#allocation4], %s673
        %s675 = sand.u32 %s96, 1
        %s676 = smul.addr %s675, 8
        %s677 = scalar_lea.vmem [#allocation5], %s676
        // Predicated region
        $region37: #{tpu_custom_call.1} parent=31 // pred_check
          %p678 = pneg %p106
        $region38: #{tpu_custom_call.1} parent=31 // pred_check_branch
          %680 = sbr.rel (%p678) target = $region40
        $region39: #{tpu_custom_call.1} parent=31 // pred_region
          %s682 = ssub.s32 128, 128
          %683 = vsyncadd %s674, %s682
          %s684 = smul.addr %s20, 2
          %s685 = smul.addr %s684, 64
          %s686 = scalar_lea.hbm %s3, %s685
          %s688 = sshll.u32 %s677, 4
          %s689 = int_to_ptr.vmem [resolvable:$true] %s688
          %691 = dma.vmem_to_hbm [thread:$0]  %s689, 128, %s686, %s674
        $region40: #{tpu_custom_call.1} parent=31 // pred_fallthru
          _
      $region32: #{tpu_custom_call.1} parent=5 // pred_fallthru
        _
      %p692 = scmp.le.s32.totalorder 2, %s15
      // Predicated region
      $region41: #{tpu_custom_call.1} parent=5 // pred_check
        %p693 = pneg %p692
      $region42: #{tpu_custom_call.1} parent=5 // pred_check_branch
        %695 = sbr.rel (%p693) target = $region44
      $region43: #{tpu_custom_call.1} parent=5 // pred_region
        %s696 = ssub.s32 %s15, 2
        // Predicated region
        $region45: #{tpu_custom_call.1} parent=43 // pred_check
          %p697 = pneg %p112
        $region46: #{tpu_custom_call.1} parent=43 // pred_check_branch
          %699 = sbr.rel (%p697) target = $region48
        $region47: #{tpu_custom_call.1} parent=43 // pred_region
          %s700 = sand.u32 %s97, 1
          %s701 = scalar_lea.sflag [#allocation4], %s700
          %s702 = sand.u32 %s97, 1
          %s703 = smul.addr %s702, 8
          %s704 = scalar_lea.vmem [#allocation5], %s703
          %705 = dma.done %s701, 128
        $region48: #{tpu_custom_call.1} parent=43 // pred_fallthru
          _
      $region44: #{tpu_custom_call.1} parent=5 // pred_fallthru
        _
    $region6: #{tpu_custom_call.1} parent=1 // loop_footer
      %s19 = sadd.s32 1, %s15
    $region7: #{tpu_custom_call.1} parent=1 // loop_footer_branch
      %14 = sbr.rel target = $region3
    $region8: #{tpu_custom_call.1} parent=1 // loop_exit
      _
    %706 = vsyncpa [#allocation3], 1
    %s707 = scalar_lea.sflag [#allocation3], 1
    %708 = vsyncpa %s707, 1
    %709 = vsyncpa [#allocation4], 1
    %s710 = scalar_lea.sflag [#allocation4], 1
    %711 = vsyncpa %s710, 1

</llo_original>
